<compile_context>
chip_gen: v7x
topology: tpu7x:2x2x1
jax: 0.10.0
libtpu: 0.0.40
codegen_flags: <defaults>
</compile_context>

<pallas_src>
import functools

import jax
import jax.numpy as jnp
from jax.experimental import pallas as pl
from jax.experimental.pallas import tpu as pltpu

_LANE = 128          # vreg lane width
_SUBLANE_F32 = 8     # f32 activations: batch tile must be a multiple of 8
_TILE_B_MAX = 512    # 512x1024 f32 x-tile = 2 MiB; ~5 MiB double-buffered total
_SPLIT_MIN_B = 128   # from here on, force >=2 batch tiles (v7x has 2 TensorCores)


def _round_up(x, m):
    return ((x + m - 1) // m) * m


def _qnet_kernel(x_ref, w1_ref, w2_ref, w3_ref, b_ref, o_ref):
    """Fused 3-layer MLP on one batch tile; weights/biases stay VMEM-resident."""
    # f32 read straight from HBM, cast on the VPU (plenty of slack here).
    x = x_ref[...].astype(jnp.bfloat16)                          # (TB, D)

    h1_w = w1_ref.shape[1]
    h2_w = w2_ref.shape[1]
    b1 = b_ref[0:1, 0:h1_w]                                      # (1, 32)  f32
    b2 = b_ref[1:2, 0:h2_w]                                      # (1, 32)  f32
    b3 = b_ref[2:3, 0:w3_ref.shape[1]]                           # (1, 128) f32

    # Layer 1: Linear + ReLU (bf16 MXU inputs, f32 accumulation + epilogue).
    h1 = jnp.dot(x, w1_ref[...], preferred_element_type=jnp.float32) + b1
    h1 = jnp.maximum(h1, 0.0)

    # Layer 2: Linear + ReLU.
    h2 = jnp.dot(h1.astype(jnp.bfloat16), w2_ref[...],
                 preferred_element_type=jnp.float32) + b2
    h2 = jnp.maximum(h2, 0.0)

    # Output layer: Linear (no activation) -> lane-dense (128-wide) f32 store.
    q = jnp.dot(h2.astype(jnp.bfloat16), w3_ref[...],
                preferred_element_type=jnp.float32) + b3
    o_ref[...] = q


def prepare_params(params):
    """One-time repack of torch-layout f32 params for the kernel.

    * w1 rows padded to a 128-multiple (matches the flattened input width);
      hidden widths (32) are NOT padded, keeping the dominant w1 DMA at its
      real size (64 KiB bf16 instead of 256 KiB lane-padded).
    * Only the final output width is padded to 128 so the store is lane-dense.
    * Biases are packed into a single (3, 128) f32 array; padded lanes are 0,
      so padded output lanes stay 0 and are sliced off in the wrapper.
    * Weights stored bf16 (native MXU dtype, halves weight DMA).
      # TODO(synk): keep w1..w3 in f32 if exact argmax parity with the torch
      # f32 model is required (kernel is HBM-bound either way).
    """
    d_in, h1 = params["w1"].shape
    _, h2 = params["w2"].shape
    _, a_sz = params["w3"].shape
    d_in_p = _round_up(d_in, _LANE)
    a_p = _round_up(a_sz, _LANE)
    bw = _round_up(max(h1, h2, a_sz), _LANE)

    w1 = jnp.pad(params["w1"], ((0, d_in_p - d_in), (0, 0))).astype(jnp.bfloat16)
    w2 = params["w2"].astype(jnp.bfloat16)
    w3 = jnp.pad(params["w3"], ((0, 0), (0, a_p - a_sz))).astype(jnp.bfloat16)

    b = jnp.zeros((3, bw), jnp.float32)
    b = b.at[0, :h1].set(params["b1"].reshape(-1))
    b = b.at[1, :h2].set(params["b2"].reshape(-1))
    b = b.at[2, :a_sz].set(params["b3"].reshape(-1))

    return {"w1": w1, "w2": w2, "w3": w3, "b": b}


def _choose_tile_b(B):
    b_al = _round_up(B, _SUBLANE_F32)
    if b_al < _SPLIT_MIN_B:
        return b_al                              # tiny batch: one small tile
    # Guarantee >=2 grid tiles so both v7x TensorCores get work, capped so the
    # double-buffered x tile stays well inside the 32 MiB scoped-VMEM default.
    half = _round_up((b_al + 1) // 2, _SUBLANE_F32)
    return min(_TILE_B_MAX, half)


@functools.partial(jax.jit, static_argnames=("action_size",))
def qnetwork_forward(state, padded_params, *, action_size):
    """Forward pass of QNetwork.

    state:         (B, C, H, W) f32 observation (flattened in torch .view order).
    padded_params: output of prepare_params.
    action_size:   true (unpadded) number of actions; used to slice the result.
    """
    B = state.shape[0]
    x = state.reshape(B, -1)                     # same flattening as torch .view(B, -1)
    d_in = x.shape[1]

    w1, w2, w3, b = (padded_params[k] for k in ("w1", "w2", "w3", "b"))
    d_in_p = w1.shape[0]
    h1, h2 = w1.shape[1], w2.shape[1]
    a_p = w3.shape[1]

    tile_b = _choose_tile_b(B)
    b_pad = _round_up(B, tile_b)
    # Keep activations f32: the kernel casts in-register, so x is read from HBM
    # exactly once.  Batch zero-pad keeps the last tile well-defined; the
    # feature pad is a no-op when d_in is already a 128-multiple (it is here).
    if b_pad != B or d_in_p != d_in:
        x = jnp.pad(x, ((0, b_pad - B), (0, d_in_p - d_in)))

    grid = (b_pad // tile_b,)
    # Weights/biases: constant block index -> fetched once, resident across tiles.
    resident = lambda arr: pl.BlockSpec(arr.shape, lambda i: (0,) * arr.ndim)

    cost = pl.CostEstimate(
        flops=2 * b_pad * (d_in_p * h1 + h1 * h2 + h2 * a_p),
        transcendentals=0,
        bytes_accessed=(b_pad * d_in_p * 4                        # x (f32)
                        + 2 * (d_in_p * h1 + h1 * h2 + h2 * a_p)  # bf16 weights
                        + b.size * 4                              # packed biases
                        + b_pad * a_p * 4),                       # output (f32)
    )

    out = pl.pallas_call(
        _qnet_kernel,
        out_shape=jax.ShapeDtypeStruct((b_pad, a_p), jnp.float32),
        grid=grid,
        in_specs=[
            pl.BlockSpec((tile_b, d_in_p), lambda i: (i, 0)),     # batch-tiled f32 x
            resident(w1), resident(w2), resident(w3), resident(b),
        ],
        out_specs=pl.BlockSpec((tile_b, a_p), lambda i: (i, 0)),
        compiler_params=pltpu.CompilerParams(
            dimension_semantics=("parallel",),    # shard batch tiles across TCs on v7x
        ),
        cost_estimate=cost,
    )(x, w1, w2, w3, b)

    return out[:B, :action_size]


def init_params(key, state_size, hiddens, action_size):
    """Deterministic synthetic parameter init (Glorot-ish uniform), f32, torch-like sizes."""
    dims = [state_size] + list(hiddens) + [action_size]
    params = {}
    for i in range(len(dims) - 1):
        key, wk, bk = jax.random.split(key, 3)
        fan_in, fan_out = dims[i], dims[i + 1]
        scale = jnp.sqrt(6.0 / (fan_in + fan_out)).astype(jnp.float32)
        params[f"w{i+1}"] = jax.random.uniform(
            wk, (fan_in, fan_out), jnp.float32, minval=-scale, maxval=scale
        )
        params[f"b{i+1}"] = jax.random.uniform(
            bk, (1, fan_out), jnp.float32, minval=-0.01, maxval=0.01
        )
    return params


if __name__ == "__main__":
    key = jax.random.PRNGKey(0)

    # Small shapes consistent with the module:
    #   obs_space.shape = (4, 16, 16) -> state_size = 1024
    #   model_config.hiddens = [32, 32], action_space.n = 4
    B, C, H, W = 2, 4, 16, 16
    hiddens = [32, 32]
    action_size = 4
    state_size = C * H * W

    key, pk, xk = jax.random.split(key, 3)
    params = init_params(pk, state_size, hiddens, action_size)
    padded_params = prepare_params(params)   # one-time repack, reused every call
    state = jax.random.normal(xk, (B, C, H, W), jnp.float32)

    q_values = qnetwork_forward(state, padded_params, action_size=action_size)
    jax.block_until_ready(q_values)
    assert q_values.shape == (B, action_size)

    # Reference 1: same bf16 matmul inputs / f32 accumulation as the kernel (tight check).
    x = state.reshape(B, -1)
    w1b = params["w1"].astype(jnp.bfloat16)
    w2b = params["w2"].astype(jnp.bfloat16)
    w3b = params["w3"].astype(jnp.bfloat16)
    h1 = jnp.maximum(
        jnp.dot(x.astype(jnp.bfloat16), w1b, preferred_element_type=jnp.float32)
        + params["b1"], 0.0)
    h2 = jnp.maximum(
        jnp.dot(h1.astype(jnp.bfloat16), w2b, preferred_element_type=jnp.float32)
        + params["b2"], 0.0)
    ref_bf16 = (jnp.dot(h2.astype(jnp.bfloat16), w3b, preferred_element_type=jnp.float32)
                + params["b3"])
    assert jnp.allclose(q_values, ref_bf16, atol=5e-3, rtol=5e-3)

    # Reference 2: pure-f32 PyTorch-semantics MLP (loose check; bf16 weights
    # introduce ~1e-2 relative error at these magnitudes).
    h1f = jnp.maximum(x @ params["w1"] + params["b1"], 0.0)
    h2f = jnp.maximum(h1f @ params["w2"] + params["b2"], 0.0)
    ref_f32 = h2f @ params["w3"] + params["b3"]
    assert jnp.allclose(q_values, ref_f32, atol=1e-1, rtol=1e-1)

    print("KERNEL_OK")
</pallas_src>

<mosaic_0001>
module attributes {stable_mosaic.version = 11 : i64} {
  func.func @_qnet_kernel(%arg0: i32, %arg1: memref<8x1024xf32, #tpu.memory_space<vmem>>, %arg2: memref<1024x32xbf16, #tpu.memory_space<vmem>>, %arg3: memref<32x32xbf16, #tpu.memory_space<vmem>>, %arg4: memref<32x128xbf16, #tpu.memory_space<vmem>>, %arg5: memref<3x128xf32, #tpu.memory_space<vmem>>, %arg6: memref<8x128xf32, #tpu.memory_space<vmem>>) attributes {dimension_semantics = [#tpu.dimension_semantics<parallel>], iteration_bounds = array<i64: 1>, scalar_prefetch = 0 : i64, scratch_operands = 0 : i64, tpu.core_type = #tpu.core_type<tc>, window_params = [{transform_indices = @transform_0, window_bounds = array<i64: 8, 1024>}, {pipeline_mode = #tpu.pipeline_mode<synchronous>, transform_indices = @transform_1, window_bounds = array<i64: 1024, 32>}, {pipeline_mode = #tpu.pipeline_mode<synchronous>, transform_indices = @transform_2, window_bounds = array<i64: 32, 32>}, {pipeline_mode = #tpu.pipeline_mode<synchronous>, transform_indices = @transform_3, window_bounds = array<i64: 32, 128>}, {pipeline_mode = #tpu.pipeline_mode<synchronous>, transform_indices = @transform_4, window_bounds = array<i64: 3, 128>}, {transform_indices = @transform_5, window_bounds = array<i64: 8, 128>}]} {
    %c0 = arith.constant 0 : index
    %c0_0 = arith.constant 0 : index
    %0 = vector.load %arg1[%c0, %c0_0] : memref<8x1024xf32, #tpu.memory_space<vmem>>, vector<8x1024xf32>
    %1 = arith.truncf %0 : vector<8x1024xf32> to vector<8x1024xbf16>
    %c0_1 = arith.constant 0 : index
    %c0_2 = arith.constant 0 : index
    %2 = vector.load %arg5[%c0_1, %c0_2] : memref<3x128xf32, #tpu.memory_space<vmem>>, vector<1x32xf32>
    %c1 = arith.constant 1 : index
    %c0_3 = arith.constant 0 : index
    %3 = vector.load %arg5[%c1, %c0_3] : memref<3x128xf32, #tpu.memory_space<vmem>>, vector<1x32xf32>
    %c2 = arith.constant 2 : index
    %c0_4 = arith.constant 0 : index
    %4 = vector.load %arg5[%c2, %c0_4] : memref<3x128xf32, #tpu.memory_space<vmem>>, vector<1x128xf32>
    %c0_5 = arith.constant 0 : index
    %c0_6 = arith.constant 0 : index
    %5 = vector.load %arg2[%c0_5, %c0_6] : memref<1024x32xbf16, #tpu.memory_space<vmem>>, vector<1024x32xbf16>
    %cst = arith.constant dense<0.000000e+00> : vector<8x32xf32>
    %6 = tpu.matmul %1, %5, %cst {dimension_numbers = #tpu.dot_dimension_numbers<[1], [0], [0], [1], [0, 0, 1, 1], [], []>} : vector<8x1024xbf16>, vector<1024x32xbf16>, vector<8x32xf32> -> vector<8x32xf32>
    %7 = vector.broadcast %2 : vector<1x32xf32> to vector<8x32xf32>
    %8 = arith.addf %6, %7 : vector<8x32xf32>
    %cst_7 = arith.constant 0.000000e+00 : f32
    %9 = vector.broadcast %cst_7 : f32 to vector<8x32xf32>
    %10 = arith.maximumf %8, %9 : vector<8x32xf32>
    %11 = arith.truncf %10 : vector<8x32xf32> to vector<8x32xbf16>
    %c0_8 = arith.constant 0 : index
    %c0_9 = arith.constant 0 : index
    %12 = vector.load %arg3[%c0_8, %c0_9] : memref<32x32xbf16, #tpu.memory_space<vmem>>, vector<32x32xbf16>
    %cst_10 = arith.constant dense<0.000000e+00> : vector<8x32xf32>
    %13 = tpu.matmul %11, %12, %cst_10 {dimension_numbers = #tpu.dot_dimension_numbers<[1], [0], [0], [1], [0, 0, 1, 1], [], []>} : vector<8x32xbf16>, vector<32x32xbf16>, vector<8x32xf32> -> vector<8x32xf32>
    %14 = vector.broadcast %3 : vector<1x32xf32> to vector<8x32xf32>
    %15 = arith.addf %13, %14 : vector<8x32xf32>
    %cst_11 = arith.constant 0.000000e+00 : f32
    %16 = vector.broadcast %cst_11 : f32 to vector<8x32xf32>
    %17 = arith.maximumf %15, %16 : vector<8x32xf32>
    %18 = arith.truncf %17 : vector<8x32xf32> to vector<8x32xbf16>
    %c0_12 = arith.constant 0 : index
    %c0_13 = arith.constant 0 : index
    %19 = vector.load %arg4[%c0_12, %c0_13] : memref<32x128xbf16, #tpu.memory_space<vmem>>, vector<32x128xbf16>
    %cst_14 = arith.constant dense<0.000000e+00> : vector<8x128xf32>
    %20 = tpu.matmul %18, %19, %cst_14 {dimension_numbers = #tpu.dot_dimension_numbers<[1], [0], [0], [1], [0, 0, 1, 1], [], []>} : vector<8x32xbf16>, vector<32x128xbf16>, vector<8x128xf32> -> vector<8x128xf32>
    %21 = vector.broadcast %4 : vector<1x128xf32> to vector<8x128xf32>
    %22 = arith.addf %20, %21 : vector<8x128xf32>
    %c0_15 = arith.constant 0 : index
    %c0_16 = arith.constant 0 : index
    %23 = vector.load %arg6[%c0_15, %c0_16] : memref<8x128xf32, #tpu.memory_space<vmem>>, vector<8x128xf32>
    tpu.vector_store %arg6[%c0_15, %c0_16], %22 {strides = array<i32>} : memref<8x128xf32, #tpu.memory_space<vmem>>, vector<8x128xf32>,
    return
  }
  func.func @transform_0(%arg0: i32) -> (i32, i32) {
    %c0_i32 = arith.constant 0 : i32
    %c0_i32_0 = arith.constant 0 : i32
    return %arg0, %c0_i32 : i32, i32
  }
  func.func @transform_1(%arg0: i32) -> (i32, i32) {
    %c0_i32 = arith.constant 0 : i32
    %c0_i32_0 = arith.constant 0 : i32
    %c0_i32_1 = arith.constant 0 : i32
    return %c0_i32, %c0_i32_0 : i32, i32
  }
  func.func @transform_2(%arg0: i32) -> (i32, i32) {
    %c0_i32 = arith.constant 0 : i32
    %c0_i32_0 = arith.constant 0 : i32
    %c0_i32_1 = arith.constant 0 : i32
    return %c0_i32, %c0_i32_0 : i32, i32
  }
  func.func @transform_3(%arg0: i32) -> (i32, i32) {
    %c0_i32 = arith.constant 0 : i32
    %c0_i32_0 = arith.constant 0 : i32
    %c0_i32_1 = arith.constant 0 : i32
    return %c0_i32, %c0_i32_0 : i32, i32
  }
  func.func @transform_4(%arg0: i32) -> (i32, i32) {
    %c0_i32 = arith.constant 0 : i32
    %c0_i32_0 = arith.constant 0 : i32
    %c0_i32_1 = arith.constant 0 : i32
    return %c0_i32, %c0_i32_0 : i32, i32
  }
  func.func @transform_5(%arg0: i32) -> (i32, i32) {
    %c0_i32 = arith.constant 0 : i32
    %c0_i32_0 = arith.constant 0 : i32
    return %arg0, %c0_i32 : i32, i32
  }
}

</mosaic_0001>

<llo_original>
// kernel: qnetwork_forward.1
$region0: #{qnetwork_forward.1}
  #allocation0 [shape = 'u32[]', space=smem, size = 0x4, offset = 0x4, fixed_abs, tag = 'smem constant byte address 0x4 - core index']
  #allocation1 [shape = 'u32[144,128]{1,0:T(1,128)}', space=vmem, size = 0x12000, scoped, tag = 'internal scratch']
  %s0 = inlined_call_operand.vmem [shape: f32[8,1024], index: 0, kind: input, shape index: {}]
  %s1 = inlined_call_operand.vmem [shape: bf16[1024,32], index: 1, kind: input, shape index: {}]
  %s2 = inlined_call_operand.vmem [shape: bf16[32,32], index: 2, kind: input, shape index: {}]
  %s3 = inlined_call_operand.vmem [shape: bf16[32,128], index: 3, kind: input, shape index: {}]
  %s4 = inlined_call_operand.vmem [shape: f32[3,128], index: 4, kind: input, shape index: {}]
  %s5 = inlined_call_operand.vmem [shape: f32[8,128], index: 5, kind: output, shape index: {}]
  %s6 = sld [smem:[#allocation0]]
  $region30: #{qnetwork_forward.1} parent=0
    _
  %s8 = ssub.s32 1, %s6
  %s9 = scalar_select 0, %s8, %s6
  // Predicated region
  $region2: #{qnetwork_forward.1} parent=0 // pred_check
    _
  $region3: #{qnetwork_forward.1} parent=0 // pred_check_branch
    %11 = sbr.rel (0) target = $region5
  $region4: #{qnetwork_forward.1} parent=0 // pred_region
    _
  $region5: #{qnetwork_forward.1} parent=0 // pred_fallthru
    _
  // Predicated region
  $region6: #{qnetwork_forward.1} parent=0 // pred_check
    _
  $region7: #{qnetwork_forward.1} parent=0 // pred_check_branch
    %13 = sbr.rel (0) target = $region9
  $region8: #{qnetwork_forward.1} parent=0 // pred_region
    _
  $region9: #{qnetwork_forward.1} parent=0 // pred_fallthru
    _
  // Predicated region
  $region10: #{qnetwork_forward.1} parent=0 // pred_check
    _
  $region11: #{qnetwork_forward.1} parent=0 // pred_check_branch
    %15 = sbr.rel (0) target = $region13
  $region12: #{qnetwork_forward.1} parent=0 // pred_region
    _
  $region13: #{qnetwork_forward.1} parent=0 // pred_fallthru
    _
  // Predicated region
  $region14: #{qnetwork_forward.1} parent=0 // pred_check
    _
  $region15: #{qnetwork_forward.1} parent=0 // pred_check_branch
    %17 = sbr.rel (0) target = $region17
  $region16: #{qnetwork_forward.1} parent=0 // pred_region
    _
  $region17: #{qnetwork_forward.1} parent=0 // pred_fallthru
    _
  // Predicated region
  $region18: #{qnetwork_forward.1} parent=0 // pred_check
    _
  $region19: #{qnetwork_forward.1} parent=0 // pred_check_branch
    %19 = sbr.rel (0) target = $region21
  $region20: #{qnetwork_forward.1} parent=0 // pred_region
    _
  $region21: #{qnetwork_forward.1} parent=0 // pred_fallthru
    _
  %v21 = vld [vmem:[%s0] sm:$0xff]
  %v22 = vld [vmem:[%s0 + $0x8] sm:$0xff]
  %v23 = vld [vmem:[%s0 + $0x10] sm:$0xff]
  %v24 = vld [vmem:[%s0 + $0x18] sm:$0xff]
  %v25 = vld [vmem:[%s0 + $0x20] sm:$0xff]
  %v26 = vld [vmem:[%s0 + $0x28] sm:$0xff]
  %v27 = vld [vmem:[%s0 + $0x30] sm:$0xff]
  %v28 = vld [vmem:[%s0 + $0x38] sm:$0xff]
  %v29 = vpack.c.bf16 %v21, %v21
  %v30 = vpack.c.bf16 %v22, %v22
  %v31 = vpack.c.bf16 %v23, %v23
  %v32 = vpack.c.bf16 %v24, %v24
  %v33 = vpack.c.bf16 %v25, %v25
  %v34 = vpack.c.bf16 %v26, %v26
  %v35 = vpack.c.bf16 %v27, %v27
  %v36 = vpack.c.bf16 %v28, %v28
  %v37 = vld [vmem:[%s4] sm:$0x1]
  %v38 = vld [vmem:[%s4 + $0x1] sm:$0x1]
  %v39 = vld [vmem:[%s4 + $0x2] sm:$0x1]
  %v40 = vld [vmem:[%s1] sm:$0xf]
  %v41 = vld [vmem:[%s1 + $0x4] sm:$0xf]
  %v42 = vld [vmem:[%s1 + $0x8] sm:$0xf]
  %v43 = vld [vmem:[%s1 + $0xc] sm:$0xf]
  %v44 = vld [vmem:[%s1 + $0x10] sm:$0xf]
  %v45 = vld [vmem:[%s1 + $0x14] sm:$0xf]
  %v46 = vld [vmem:[%s1 + $0x18] sm:$0xf]
  %v47 = vld [vmem:[%s1 + $0x1c] sm:$0xf]
  %v48 = vld [vmem:[%s1 + $0x20] sm:$0xf]
  %v49 = vld [vmem:[%s1 + $0x24] sm:$0xf]
  %v50 = vld [vmem:[%s1 + $0x28] sm:$0xf]
  %v51 = vld [vmem:[%s1 + $0x2c] sm:$0xf]
  %v52 = vld [vmem:[%s1 + $0x30] sm:$0xf]
  %v53 = vld [vmem:[%s1 + $0x34] sm:$0xf]
  %v54 = vld [vmem:[%s1 + $0x38] sm:$0xf]
  %v55 = vld [vmem:[%s1 + $0x3c] sm:$0xf]
  %v56 = vld [vmem:[%s1 + $0x40] sm:$0xf]
  %v57 = vld [vmem:[%s1 + $0x44] sm:$0xf]
  %v58 = vld [vmem:[%s1 + $0x48] sm:$0xf]
  %v59 = vld [vmem:[%s1 + $0x4c] sm:$0xf]
  %v60 = vld [vmem:[%s1 + $0x50] sm:$0xf]
  %v61 = vld [vmem:[%s1 + $0x54] sm:$0xf]
  %v62 = vld [vmem:[%s1 + $0x58] sm:$0xf]
  %v63 = vld [vmem:[%s1 + $0x5c] sm:$0xf]
  %v64 = vld [vmem:[%s1 + $0x60] sm:$0xf]
  %v65 = vld [vmem:[%s1 + $0x64] sm:$0xf]
  %v66 = vld [vmem:[%s1 + $0x68] sm:$0xf]
  %v67 = vld [vmem:[%s1 + $0x6c] sm:$0xf]
  %v68 = vld [vmem:[%s1 + $0x70] sm:$0xf]
  %v69 = vld [vmem:[%s1 + $0x74] sm:$0xf]
  %v70 = vld [vmem:[%s1 + $0x78] sm:$0xf]
  %v71 = vld [vmem:[%s1 + $0x7c] sm:$0xf]
  %v72 = vld [vmem:[%s1 + $0x80] sm:$0xf]
  %v73 = vld [vmem:[%s1 + $0x84] sm:$0xf]
  %v74 = vld [vmem:[%s1 + $0x88] sm:$0xf]
  %v75 = vld [vmem:[%s1 + $0x8c] sm:$0xf]
  %v76 = vld [vmem:[%s1 + $0x90] sm:$0xf]
  %v77 = vld [vmem:[%s1 + $0x94] sm:$0xf]
  %v78 = vld [vmem:[%s1 + $0x98] sm:$0xf]
  %v79 = vld [vmem:[%s1 + $0x9c] sm:$0xf]
  %v80 = vld [vmem:[%s1 + $0xa0] sm:$0xf]
  %v81 = vld [vmem:[%s1 + $0xa4] sm:$0xf]
  %v82 = vld [vmem:[%s1 + $0xa8] sm:$0xf]
  %v83 = vld [vmem:[%s1 + $0xac] sm:$0xf]
  %v84 = vld [vmem:[%s1 + $0xb0] sm:$0xf]
  %v85 = vld [vmem:[%s1 + $0xb4] sm:$0xf]
  %v86 = vld [vmem:[%s1 + $0xb8] sm:$0xf]
  %v87 = vld [vmem:[%s1 + $0xbc] sm:$0xf]
  %v88 = vld [vmem:[%s1 + $0xc0] sm:$0xf]
  %v89 = vld [vmem:[%s1 + $0xc4] sm:$0xf]
  %v90 = vld [vmem:[%s1 + $0xc8] sm:$0xf]
  %v91 = vld [vmem:[%s1 + $0xcc] sm:$0xf]
  %v92 = vld [vmem:[%s1 + $0xd0] sm:$0xf]
  %v93 = vld [vmem:[%s1 + $0xd4] sm:$0xf]
  %v94 = vld [vmem:[%s1 + $0xd8] sm:$0xf]
  %v95 = vld [vmem:[%s1 + $0xdc] sm:$0xf]
  %v96 = vld [vmem:[%s1 + $0xe0] sm:$0xf]
  %v97 = vld [vmem:[%s1 + $0xe4] sm:$0xf]
  %v98 = vld [vmem:[%s1 + $0xe8] sm:$0xf]
  %v99 = vld [vmem:[%s1 + $0xec] sm:$0xf]
  %v100 = vld [vmem:[%s1 + $0xf0] sm:$0xf]
  %v101 = vld [vmem:[%s1 + $0xf4] sm:$0xf]
  %v102 = vld [vmem:[%s1 + $0xf8] sm:$0xf]
  %v103 = vld [vmem:[%s1 + $0xfc] sm:$0xf]
  %v104 = vld [vmem:[%s1 + $0x100] sm:$0xf]
  %v105 = vld [vmem:[%s1 + $0x104] sm:$0xf]
  %v106 = vld [vmem:[%s1 + $0x108] sm:$0xf]
  %v107 = vld [vmem:[%s1 + $0x10c] sm:$0xf]
  %v108 = vld [vmem:[%s1 + $0x110] sm:$0xf]
  %v109 = vld [vmem:[%s1 + $0x114] sm:$0xf]
  %v110 = vld [vmem:[%s1 + $0x118] sm:$0xf]
  %v111 = vld [vmem:[%s1 + $0x11c] sm:$0xf]
  %v112 = vld [vmem:[%s1 + $0x120] sm:$0xf]
  %v113 = vld [vmem:[%s1 + $0x124] sm:$0xf]
  %v114 = vld [vmem:[%s1 + $0x128] sm:$0xf]
  %v115 = vld [vmem:[%s1 + $0x12c] sm:$0xf]
  %v116 = vld [vmem:[%s1 + $0x130] sm:$0xf]
  %v117 = vld [vmem:[%s1 + $0x134] sm:$0xf]
  %v118 = vld [vmem:[%s1 + $0x138] sm:$0xf]
  %v119 = vld [vmem:[%s1 + $0x13c] sm:$0xf]
  %v120 = vld [vmem:[%s1 + $0x140] sm:$0xf]
  %v121 = vld [vmem:[%s1 + $0x144] sm:$0xf]
  %v122 = vld [vmem:[%s1 + $0x148] sm:$0xf]
  %v123 = vld [vmem:[%s1 + $0x14c] sm:$0xf]
  %v124 = vld [vmem:[%s1 + $0x150] sm:$0xf]
  %v125 = vld [vmem:[%s1 + $0x154] sm:$0xf]
  %v126 = vld [vmem:[%s1 + $0x158] sm:$0xf]
  %v127 = vld [vmem:[%s1 + $0x15c] sm:$0xf]
  %v128 = vld [vmem:[%s1 + $0x160] sm:$0xf]
  %v129 = vld [vmem:[%s1 + $0x164] sm:$0xf]
  %v130 = vld [vmem:[%s1 + $0x168] sm:$0xf]
  %v131 = vld [vmem:[%s1 + $0x16c] sm:$0xf]
  %v132 = vld [vmem:[%s1 + $0x170] sm:$0xf]
  %v133 = vld [vmem:[%s1 + $0x174] sm:$0xf]
  %v134 = vld [vmem:[%s1 + $0x178] sm:$0xf]
  %v135 = vld [vmem:[%s1 + $0x17c] sm:$0xf]
  %v136 = vld [vmem:[%s1 + $0x180] sm:$0xf]
  %v137 = vld [vmem:[%s1 + $0x184] sm:$0xf]
  %v138 = vld [vmem:[%s1 + $0x188] sm:$0xf]
  %v139 = vld [vmem:[%s1 + $0x18c] sm:$0xf]
  %v140 = vld [vmem:[%s1 + $0x190] sm:$0xf]
  %v141 = vld [vmem:[%s1 + $0x194] sm:$0xf]
  %v142 = vld [vmem:[%s1 + $0x198] sm:$0xf]
  %v143 = vld [vmem:[%s1 + $0x19c] sm:$0xf]
  %v144 = vld [vmem:[%s1 + $0x1a0] sm:$0xf]
  %v145 = vld [vmem:[%s1 + $0x1a4] sm:$0xf]
  %v146 = vld [vmem:[%s1 + $0x1a8] sm:$0xf]
  %v147 = vld [vmem:[%s1 + $0x1ac] sm:$0xf]
  %v148 = vld [vmem:[%s1 + $0x1b0] sm:$0xf]
  %v149 = vld [vmem:[%s1 + $0x1b4] sm:$0xf]
  %v150 = vld [vmem:[%s1 + $0x1b8] sm:$0xf]
  %v151 = vld [vmem:[%s1 + $0x1bc] sm:$0xf]
  %v152 = vld [vmem:[%s1 + $0x1c0] sm:$0xf]
  %v153 = vld [vmem:[%s1 + $0x1c4] sm:$0xf]
  %v154 = vld [vmem:[%s1 + $0x1c8] sm:$0xf]
  %v155 = vld [vmem:[%s1 + $0x1cc] sm:$0xf]
  %v156 = vld [vmem:[%s1 + $0x1d0] sm:$0xf]
  %v157 = vld [vmem:[%s1 + $0x1d4] sm:$0xf]
  %v158 = vld [vmem:[%s1 + $0x1d8] sm:$0xf]
  %v159 = vld [vmem:[%s1 + $0x1dc] sm:$0xf]
  %v160 = vld [vmem:[%s1 + $0x1e0] sm:$0xf]
  %v161 = vld [vmem:[%s1 + $0x1e4] sm:$0xf]
  %v162 = vld [vmem:[%s1 + $0x1e8] sm:$0xf]
  %v163 = vld [vmem:[%s1 + $0x1ec] sm:$0xf]
  %v164 = vld [vmem:[%s1 + $0x1f0] sm:$0xf]
  %v165 = vld [vmem:[%s1 + $0x1f4] sm:$0xf]
  %v166 = vld [vmem:[%s1 + $0x1f8] sm:$0xf]
  %v167 = vld [vmem:[%s1 + $0x1fc] sm:$0xf]
  %v168 = vlaneseq
  %v169 = vshrl.u32 %v168, 7
  %v170 = vsub.s32 0, %v169
  %v171 = vrot.slane %v37, %v170
  %v300 = vunpack.c.l.b16 %v40
  %v301 = vunpack.c.l.b16 %v41
  %v302 = vunpack.c.l.b16 %v42
  %v303 = vunpack.c.l.b16 %v43
  %v304 = vunpack.c.l.b16 %v44
  %v305 = vunpack.c.l.b16 %v45
  %v306 = vunpack.c.l.b16 %v46
  %v307 = vunpack.c.l.b16 %v47
  %v308 = vunpack.c.l.b16 %v48
  %v309 = vunpack.c.l.b16 %v49
  %v310 = vunpack.c.l.b16 %v50
  %v311 = vunpack.c.l.b16 %v51
  %v312 = vunpack.c.l.b16 %v52
  %v313 = vunpack.c.l.b16 %v53
  %v314 = vunpack.c.l.b16 %v54
  %v315 = vunpack.c.l.b16 %v55
  %v316 = vunpack.c.l.b16 %v56
  %v317 = vunpack.c.l.b16 %v57
  %v318 = vunpack.c.l.b16 %v58
  %v319 = vunpack.c.l.b16 %v59
  %v320 = vunpack.c.l.b16 %v60
  %v321 = vunpack.c.l.b16 %v61
  %v322 = vunpack.c.l.b16 %v62
  %v323 = vunpack.c.l.b16 %v63
  %v324 = vunpack.c.l.b16 %v64
  %v325 = vunpack.c.l.b16 %v65
  %v326 = vunpack.c.l.b16 %v66
  %v327 = vunpack.c.l.b16 %v67
  %v328 = vunpack.c.l.b16 %v68
  %v329 = vunpack.c.l.b16 %v69
  %v330 = vunpack.c.l.b16 %v70
  %v331 = vunpack.c.l.b16 %v71
  %v332 = vunpack.c.l.b16 %v72
  %v333 = vunpack.c.l.b16 %v73
  %v334 = vunpack.c.l.b16 %v74
  %v335 = vunpack.c.l.b16 %v75
  %v336 = vunpack.c.l.b16 %v76
  %v337 = vunpack.c.l.b16 %v77
  %v338 = vunpack.c.l.b16 %v78
  %v339 = vunpack.c.l.b16 %v79
  %v340 = vunpack.c.l.b16 %v80
  %v341 = vunpack.c.l.b16 %v81
  %v342 = vunpack.c.l.b16 %v82
  %v343 = vunpack.c.l.b16 %v83
  %v344 = vunpack.c.l.b16 %v84
  %v345 = vunpack.c.l.b16 %v85
  %v346 = vunpack.c.l.b16 %v86
  %v347 = vunpack.c.l.b16 %v87
  %v348 = vunpack.c.l.b16 %v88
  %v349 = vunpack.c.l.b16 %v89
  %v350 = vunpack.c.l.b16 %v90
  %v351 = vunpack.c.l.b16 %v91
  %v352 = vunpack.c.l.b16 %v92
  %v353 = vunpack.c.l.b16 %v93
  %v354 = vunpack.c.l.b16 %v94
  %v355 = vunpack.c.l.b16 %v95
  %v356 = vunpack.c.l.b16 %v96
  %v357 = vunpack.c.l.b16 %v97
  %v358 = vunpack.c.l.b16 %v98
  %v359 = vunpack.c.l.b16 %v99
  %v360 = vunpack.c.l.b16 %v100
  %v361 = vunpack.c.l.b16 %v101
  %v362 = vunpack.c.l.b16 %v102
  %v363 = vunpack.c.l.b16 %v103
  %v364 = vunpack.c.l.b16 %v104
  %v365 = vunpack.c.l.b16 %v105
  %v366 = vunpack.c.l.b16 %v106
  %v367 = vunpack.c.l.b16 %v107
  %v368 = vunpack.c.l.b16 %v108
  %v369 = vunpack.c.l.b16 %v109
  %v370 = vunpack.c.l.b16 %v110
  %v371 = vunpack.c.l.b16 %v111
  %v372 = vunpack.c.l.b16 %v112
  %v373 = vunpack.c.l.b16 %v113
  %v374 = vunpack.c.l.b16 %v114
  %v375 = vunpack.c.l.b16 %v115
  %v376 = vunpack.c.l.b16 %v116
  %v377 = vunpack.c.l.b16 %v117
  %v378 = vunpack.c.l.b16 %v118
  %v379 = vunpack.c.l.b16 %v119
  %v380 = vunpack.c.l.b16 %v120
  %v381 = vunpack.c.l.b16 %v121
  %v382 = vunpack.c.l.b16 %v122
  %v383 = vunpack.c.l.b16 %v123
  %v384 = vunpack.c.l.b16 %v124
  %v385 = vunpack.c.l.b16 %v125
  %v386 = vunpack.c.l.b16 %v126
  %v387 = vunpack.c.l.b16 %v127
  %v388 = vunpack.c.l.b16 %v128
  %v389 = vunpack.c.l.b16 %v129
  %v390 = vunpack.c.l.b16 %v130
  %v391 = vunpack.c.l.b16 %v131
  %v392 = vunpack.c.l.b16 %v132
  %v393 = vunpack.c.l.b16 %v133
  %v394 = vunpack.c.l.b16 %v134
  %v395 = vunpack.c.l.b16 %v135
  %v396 = vunpack.c.l.b16 %v136
  %v397 = vunpack.c.l.b16 %v137
  %v398 = vunpack.c.l.b16 %v138
  %v399 = vunpack.c.l.b16 %v139
  %v400 = vunpack.c.l.b16 %v140
  %v401 = vunpack.c.l.b16 %v141
  %v402 = vunpack.c.l.b16 %v142
  %v403 = vunpack.c.l.b16 %v143
  %v404 = vunpack.c.l.b16 %v144
  %v405 = vunpack.c.l.b16 %v145
  %v406 = vunpack.c.l.b16 %v146
  %v407 = vunpack.c.l.b16 %v147
  %v408 = vunpack.c.l.b16 %v148
  %v409 = vunpack.c.l.b16 %v149
  %v410 = vunpack.c.l.b16 %v150
  %v411 = vunpack.c.l.b16 %v151
  %v412 = vunpack.c.l.b16 %v152
  %v413 = vunpack.c.l.b16 %v153
  %v414 = vunpack.c.l.b16 %v154
  %v415 = vunpack.c.l.b16 %v155
  %v416 = vunpack.c.l.b16 %v156
  %v417 = vunpack.c.l.b16 %v157
  %v418 = vunpack.c.l.b16 %v158
  %v419 = vunpack.c.l.b16 %v159
  %v420 = vunpack.c.l.b16 %v160
  %v421 = vunpack.c.l.b16 %v161
  %v422 = vunpack.c.l.b16 %v162
  %v423 = vunpack.c.l.b16 %v163
  %v424 = vunpack.c.l.b16 %v164
  %v425 = vunpack.c.l.b16 %v165
  %v426 = vunpack.c.l.b16 %v166
  %v427 = vunpack.c.l.b16 %v167
  %v428 = vpack.c.b16 %v301, %v300
  %v429 = vpack.c.b16 %v303, %v302
  %v430 = vpack.c.b16 %v305, %v304
  %v431 = vpack.c.b16 %v307, %v306
  %v432 = vpack.c.b16 %v309, %v308
  %v433 = vpack.c.b16 %v311, %v310
  %v434 = vpack.c.b16 %v313, %v312
  %v435 = vpack.c.b16 %v315, %v314
  %v436 = vpack.c.b16 %v317, %v316
  %v437 = vpack.c.b16 %v319, %v318
  %v438 = vpack.c.b16 %v321, %v320
  %v439 = vpack.c.b16 %v323, %v322
  %v440 = vpack.c.b16 %v325, %v324
  %v441 = vpack.c.b16 %v327, %v326
  %v442 = vpack.c.b16 %v329, %v328
  %v443 = vpack.c.b16 %v331, %v330
  %v444 = vpack.c.b16 %v333, %v332
  %v445 = vpack.c.b16 %v335, %v334
  %v446 = vpack.c.b16 %v337, %v336
  %v447 = vpack.c.b16 %v339, %v338
  %v448 = vpack.c.b16 %v341, %v340
  %v449 = vpack.c.b16 %v343, %v342
  %v450 = vpack.c.b16 %v345, %v344
  %v451 = vpack.c.b16 %v347, %v346
  %v452 = vpack.c.b16 %v349, %v348
  %v453 = vpack.c.b16 %v351, %v350
  %v454 = vpack.c.b16 %v353, %v352
  %v455 = vpack.c.b16 %v355, %v354
  %v456 = vpack.c.b16 %v357, %v356
  %v457 = vpack.c.b16 %v359, %v358
  %v458 = vpack.c.b16 %v361, %v360
  %v459 = vpack.c.b16 %v363, %v362
  %v460 = vpack.c.b16 %v365, %v364
  %v461 = vpack.c.b16 %v367, %v366
  %v462 = vpack.c.b16 %v369, %v368
  %v463 = vpack.c.b16 %v371, %v370
  %v464 = vpack.c.b16 %v373, %v372
  %v465 = vpack.c.b16 %v375, %v374
  %v466 = vpack.c.b16 %v377, %v376
  %v467 = vpack.c.b16 %v379, %v378
  %v468 = vpack.c.b16 %v381, %v380
  %v469 = vpack.c.b16 %v383, %v382
  %v470 = vpack.c.b16 %v385, %v384
  %v471 = vpack.c.b16 %v387, %v386
  %v472 = vpack.c.b16 %v389, %v388
  %v473 = vpack.c.b16 %v391, %v390
  %v474 = vpack.c.b16 %v393, %v392
  %v475 = vpack.c.b16 %v395, %v394
  %v476 = vpack.c.b16 %v397, %v396
  %v477 = vpack.c.b16 %v399, %v398
  %v478 = vpack.c.b16 %v401, %v400
  %v479 = vpack.c.b16 %v403, %v402
  %v480 = vpack.c.b16 %v405, %v404
  %v481 = vpack.c.b16 %v407, %v406
  %v482 = vpack.c.b16 %v409, %v408
  %v483 = vpack.c.b16 %v411, %v410
  %v484 = vpack.c.b16 %v413, %v412
  %v485 = vpack.c.b16 %v415, %v414
  %v486 = vpack.c.b16 %v417, %v416
  %v487 = vpack.c.b16 %v419, %v418
  %v488 = vpack.c.b16 %v421, %v420
  %v489 = vpack.c.b16 %v423, %v422
  %v490 = vpack.c.b16 %v425, %v424
  %v491 = vpack.c.b16 %v427, %v426
  %556 = vmatprep.subr.bf16.mxu0 0
  %557 = vmatpush1.bf16.msra.mxu0 %v428
  %558 = vmatprep.subr.bf16.mxu0 0
  %559 = vmatpush1.bf16.msra.mxu0 %v429
  %560 = vmatprep.subr.bf16.mxu0 0
  %561 = vmatpush1.bf16.msra.mxu0 %v430
  %562 = vmatprep.subr.bf16.mxu0 0
  %563 = vmatpush1.bf16.msra.mxu0 %v431
  %564 = vmatprep.subr.bf16.mxu0 0
  %565 = vmatpush1.bf16.msra.mxu0 %v432
  %566 = vmatprep.subr.bf16.mxu0 0
  %567 = vmatpush1.bf16.msra.mxu0 %v433
  %568 = vmatprep.subr.bf16.mxu0 0
  %569 = vmatpush1.bf16.msra.mxu0 %v434
  %570 = vmatprep.subr.bf16.mxu0 0
  %571 = vmatpush1.bf16.msra.mxu0 %v435
  %572 = vmatprep.subr.bf16.mxu0 0
  %573 = vmatpush1.bf16.msra.mxu0 %v436
  %574 = vmatprep.subr.bf16.mxu0 0
  %575 = vmatpush1.bf16.msra.mxu0 %v437
  %576 = vmatprep.subr.bf16.mxu0 0
  %577 = vmatpush1.bf16.msra.mxu0 %v438
  %578 = vmatprep.subr.bf16.mxu0 0
  %579 = vmatpush1.bf16.msra.mxu0 %v439
  %580 = vmatprep.subr.bf16.mxu0 0
  %581 = vmatpush1.bf16.msra.mxu0 %v440
  %582 = vmatprep.subr.bf16.mxu0 0
  %583 = vmatpush1.bf16.msra.mxu0 %v441
  %584 = vmatprep.subr.bf16.mxu0 0
  %585 = vmatpush1.bf16.msra.mxu0 %v442
  %586 = vmatprep.subr.bf16.mxu0 0
  %587 = vmatpush1.bf16.msra.mxu0 %v443
  %588 = vmatprep.mubr.bf16.mxu0 %v30
  %589 = vmatmul.mubr.bf16.gmra.mrb[0].mxu0 %v29
  %v590 = vpop.f32.mrb[0].mxu0
  %v591 = vadd.f32 %v171, %v590
  %v592 = vpop.f32.mrb[0].mxu0
  %v593 = vpop.f32.mrb[0].mxu0
  %v594 = vpop.f32.mrb[0].mxu0
  %595 = vdwg.mxu0
  %596 = vmatprep.subr.bf16.mxu0 0
  %597 = vmatpush1.bf16.msra.mxu0 %v444
  %598 = vmatprep.subr.bf16.mxu0 0
  %599 = vmatpush1.bf16.msra.mxu0 %v445
  %600 = vmatprep.subr.bf16.mxu0 0
  %601 = vmatpush1.bf16.msra.mxu0 %v446
  %602 = vmatprep.subr.bf16.mxu0 0
  %603 = vmatpush1.bf16.msra.mxu0 %v447
  %604 = vmatprep.subr.bf16.mxu0 0
  %605 = vmatpush1.bf16.msra.mxu0 %v448
  %606 = vmatprep.subr.bf16.mxu0 0
  %607 = vmatpush1.bf16.msra.mxu0 %v449
  %608 = vmatprep.subr.bf16.mxu0 0
  %609 = vmatpush1.bf16.msra.mxu0 %v450
  %610 = vmatprep.subr.bf16.mxu0 0
  %611 = vmatpush1.bf16.msra.mxu0 %v451
  %612 = vmatprep.subr.bf16.mxu0 0
  %613 = vmatpush1.bf16.msra.mxu0 %v452
  %614 = vmatprep.subr.bf16.mxu0 0
  %615 = vmatpush1.bf16.msra.mxu0 %v453
  %616 = vmatprep.subr.bf16.mxu0 0
  %617 = vmatpush1.bf16.msra.mxu0 %v454
  %618 = vmatprep.subr.bf16.mxu0 0
  %619 = vmatpush1.bf16.msra.mxu0 %v455
  %620 = vmatprep.subr.bf16.mxu0 0
  %621 = vmatpush1.bf16.msra.mxu0 %v456
  %622 = vmatprep.subr.bf16.mxu0 0
  %623 = vmatpush1.bf16.msra.mxu0 %v457
  %624 = vmatprep.subr.bf16.mxu0 0
  %625 = vmatpush1.bf16.msra.mxu0 %v458
  %626 = vmatprep.subr.bf16.mxu0 0
  %627 = vmatpush1.bf16.msra.mxu0 %v459
  %628 = vmatprep.mubr.bf16.mxu0 %v32
  %629 = vmatmul.mubr.bf16.gmra.mrb[0].mxu0 %v31
  %v630 = vpop.f32.mrb[0].mxu0
  %v631 = vadd.f32 %v591, %v630
  %v632 = vpop.f32.mrb[0].mxu0
  %v633 = vpop.f32.mrb[0].mxu0
  %v634 = vpop.f32.mrb[0].mxu0
  %635 = vdwg.mxu0
  %636 = vmatprep.subr.bf16.mxu0 0
  %637 = vmatpush1.bf16.msra.mxu0 %v460
  %638 = vmatprep.subr.bf16.mxu0 0
  %639 = vmatpush1.bf16.msra.mxu0 %v461
  %640 = vmatprep.subr.bf16.mxu0 0
  %641 = vmatpush1.bf16.msra.mxu0 %v462
  %642 = vmatprep.subr.bf16.mxu0 0
  %643 = vmatpush1.bf16.msra.mxu0 %v463
  %644 = vmatprep.subr.bf16.mxu0 0
  %645 = vmatpush1.bf16.msra.mxu0 %v464
  %646 = vmatprep.subr.bf16.mxu0 0
  %647 = vmatpush1.bf16.msra.mxu0 %v465
  %648 = vmatprep.subr.bf16.mxu0 0
  %649 = vmatpush1.bf16.msra.mxu0 %v466
  %650 = vmatprep.subr.bf16.mxu0 0
  %651 = vmatpush1.bf16.msra.mxu0 %v467
  %652 = vmatprep.subr.bf16.mxu0 0
  %653 = vmatpush1.bf16.msra.mxu0 %v468
  %654 = vmatprep.subr.bf16.mxu0 0
  %655 = vmatpush1.bf16.msra.mxu0 %v469
  %656 = vmatprep.subr.bf16.mxu0 0
  %657 = vmatpush1.bf16.msra.mxu0 %v470
  %658 = vmatprep.subr.bf16.mxu0 0
  %659 = vmatpush1.bf16.msra.mxu0 %v471
  %660 = vmatprep.subr.bf16.mxu0 0
  %661 = vmatpush1.bf16.msra.mxu0 %v472
  %662 = vmatprep.subr.bf16.mxu0 0
  %663 = vmatpush1.bf16.msra.mxu0 %v473
  %664 = vmatprep.subr.bf16.mxu0 0
  %665 = vmatpush1.bf16.msra.mxu0 %v474
  %666 = vmatprep.subr.bf16.mxu0 0
  %667 = vmatpush1.bf16.msra.mxu0 %v475
  %668 = vmatprep.mubr.bf16.mxu0 %v34
  %669 = vmatmul.mubr.bf16.gmra.mrb[0].mxu0 %v33
  %v670 = vpop.f32.mrb[0].mxu0
  %v671 = vadd.f32 %v631, %v670
  %v672 = vpop.f32.mrb[0].mxu0
  %v673 = vpop.f32.mrb[0].mxu0
  %v674 = vpop.f32.mrb[0].mxu0
  %675 = vdwg.mxu0
  %676 = vmatprep.subr.bf16.mxu0 0
  %677 = vmatpush1.bf16.msra.mxu0 %v476
  %678 = vmatprep.subr.bf16.mxu0 0
  %679 = vmatpush1.bf16.msra.mxu0 %v477
  %680 = vmatprep.subr.bf16.mxu0 0
  %681 = vmatpush1.bf16.msra.mxu0 %v478
  %682 = vmatprep.subr.bf16.mxu0 0
  %683 = vmatpush1.bf16.msra.mxu0 %v479
  %684 = vmatprep.subr.bf16.mxu0 0
  %685 = vmatpush1.bf16.msra.mxu0 %v480
  %686 = vmatprep.subr.bf16.mxu0 0
  %687 = vmatpush1.bf16.msra.mxu0 %v481
  %688 = vmatprep.subr.bf16.mxu0 0
  %689 = vmatpush1.bf16.msra.mxu0 %v482
  %690 = vmatprep.subr.bf16.mxu0 0
  %691 = vmatpush1.bf16.msra.mxu0 %v483
  %692 = vmatprep.subr.bf16.mxu0 0
  %693 = vmatpush1.bf16.msra.mxu0 %v484
  %694 = vmatprep.subr.bf16.mxu0 0
  %695 = vmatpush1.bf16.msra.mxu0 %v485
  %696 = vmatprep.subr.bf16.mxu0 0
  %697 = vmatpush1.bf16.msra.mxu0 %v486
  %698 = vmatprep.subr.bf16.mxu0 0
  %699 = vmatpush1.bf16.msra.mxu0 %v487
  %700 = vmatprep.subr.bf16.mxu0 0
  %701 = vmatpush1.bf16.msra.mxu0 %v488
  %702 = vmatprep.subr.bf16.mxu0 0
  %703 = vmatpush1.bf16.msra.mxu0 %v489
  %704 = vmatprep.subr.bf16.mxu0 0
  %705 = vmatpush1.bf16.msra.mxu0 %v490
  %706 = vmatprep.subr.bf16.mxu0 0
  %707 = vmatpush1.bf16.msra.mxu0 %v491
  %708 = vmatprep.mubr.bf16.mxu0 %v36
  %709 = vmatmul.mubr.bf16.gmra.mrb[0].mxu0 %v35
  %v710 = vpop.f32.mrb[0].mxu0
  %v711 = vadd.f32 %v671, %v710
  %v712 = vpop.f32.mrb[0].mxu0
  %v713 = vpop.f32.mrb[0].mxu0
  %v714 = vpop.f32.mrb[0].mxu0
  %715 = vdwg.mxu0
  %v716 = vmax.f32 %v711, 0.0
  %v717 = vpack.c.bf16 %v716, %v716
  %v718 = vld [vmem:[%s2] sm:$0xf]
  %v719 = vld [vmem:[%s2 + $0x4] sm:$0xf]
  %v720 = vld [vmem:[%s2 + $0x8] sm:$0xf]
  %v721 = vld [vmem:[%s2 + $0xc] sm:$0xf]
  %v722 = vlaneseq
  %v723 = vshrl.u32 %v722, 7
  %v724 = vsub.s32 0, %v723
  %v725 = vrot.slane %v38, %v724
  %v730 = vunpack.c.l.b16 %v718
  %v731 = vunpack.c.l.b16 %v719
  %v732 = vunpack.c.l.b16 %v720
  %v733 = vunpack.c.l.b16 %v721
  %v734 = vpack.c.b16 %v731, %v730
  %v735 = vpack.c.b16 %v733, %v732
  %vm738 = vcmask 261120
  %v740 = vsel %vm738, %v717, 0
  %742 = vmatprep.subr.bf16.mxu0 0
  %743 = vmatpush1.bf16.msra.mxu0 %v734
  %744 = vmatprep.subr.bf16.mxu0 0
  %745 = vmatpush1.bf16.msra.mxu0 %v735
  %746 = vmatprep.subr.bf16.mxu0 0
  %747 = vmatpush1.bf16.msra.mxu0 0
  %748 = vmatprep.subr.bf16.mxu0 0
  %749 = vmatpush1.bf16.msra.mxu0 0
  %750 = vmatprep.subr.bf16.mxu0 0
  %751 = vmatpush1.bf16.msra.mxu0 0
  %752 = vmatprep.subr.bf16.mxu0 0
  %753 = vmatpush1.bf16.msra.mxu0 0
  %754 = vmatprep.subr.bf16.mxu0 0
  %755 = vmatpush1.bf16.msra.mxu0 0
  %756 = vmatprep.subr.bf16.mxu0 0
  %757 = vmatpush1.bf16.msra.mxu0 0
  %758 = vmatprep.subr.bf16.mxu0 0
  %759 = vmatpush1.bf16.msra.mxu0 0
  %760 = vmatprep.subr.bf16.mxu0 0
  %761 = vmatpush1.bf16.msra.mxu0 0
  %762 = vmatprep.subr.bf16.mxu0 0
  %763 = vmatpush1.bf16.msra.mxu0 0
  %764 = vmatprep.subr.bf16.mxu0 0
  %765 = vmatpush1.bf16.msra.mxu0 0
  %766 = vmatprep.subr.bf16.mxu0 0
  %767 = vmatpush1.bf16.msra.mxu0 0
  %768 = vmatprep.subr.bf16.mxu0 0
  %769 = vmatpush1.bf16.msra.mxu0 0
  %770 = vmatprep.subr.bf16.mxu0 0
  %771 = vmatpush1.bf16.msra.mxu0 0
  %772 = vmatprep.subr.bf16.mxu0 0
  %773 = vmatpush1.bf16.msra.mxu0 0
  %774 = vmatprep.mubr.bf16.mxu0 0
  %775 = vmatmul.mubr.bf16.gmra.mrb[0].mxu0 %v740
  %v776 = vpop.f32.mrb[0].mxu0
  %v777 = vadd.f32 %v725, %v776
  %v778 = vpop.f32.mrb[0].mxu0
  %v779 = vpop.f32.mrb[0].mxu0
  %v780 = vpop.f32.mrb[0].mxu0
  %781 = vdwg.mxu0
  %v782 = vmax.f32 %v777, 0.0
  %v783 = vpack.c.bf16 %v782, %v782
  %v784 = vld [vmem:[%s3] sm:$0xf]
  %v785 = vld [vmem:[%s3 + $0x4] sm:$0xf]
  %v786 = vld [vmem:[%s3 + $0x8] sm:$0xf]
  %v787 = vld [vmem:[%s3 + $0xc] sm:$0xf]
  %v788 = vlaneseq
  %v789 = vshrl.u32 %v788, 7
  %v790 = vsub.s32 0, %v789
  %v791 = vrot.slane %v39, %v790
  %v796 = vunpack.c.l.b16 %v784
  %v797 = vunpack.c.l.b16 %v785
  %v798 = vunpack.c.l.b16 %v786
  %v799 = vunpack.c.l.b16 %v787
  %v800 = vpack.c.b16 %v797, %v796
  %v801 = vpack.c.b16 %v799, %v798
  %v805 = vsel %vm738, %v783, 0
  %807 = vmatprep.subr.bf16.mxu0 0
  %808 = vmatpush1.bf16.msra.mxu0 %v800
  %809 = vmatprep.subr.bf16.mxu0 0
  %810 = vmatpush1.bf16.msra.mxu0 %v801
  %811 = vmatprep.subr.bf16.mxu0 0
  %812 = vmatpush1.bf16.msra.mxu0 0
  %813 = vmatprep.subr.bf16.mxu0 0
  %814 = vmatpush1.bf16.msra.mxu0 0
  %815 = vmatprep.subr.bf16.mxu0 0
  %816 = vmatpush1.bf16.msra.mxu0 0
  %817 = vmatprep.subr.bf16.mxu0 0
  %818 = vmatpush1.bf16.msra.mxu0 0
  %819 = vmatprep.subr.bf16.mxu0 0
  %820 = vmatpush1.bf16.msra.mxu0 0
  %821 = vmatprep.subr.bf16.mxu0 0
  %822 = vmatpush1.bf16.msra.mxu0 0
  %823 = vmatprep.subr.bf16.mxu0 0
  %824 = vmatpush1.bf16.msra.mxu0 0
  %825 = vmatprep.subr.bf16.mxu0 0
  %826 = vmatpush1.bf16.msra.mxu0 0
  %827 = vmatprep.subr.bf16.mxu0 0
  %828 = vmatpush1.bf16.msra.mxu0 0
  %829 = vmatprep.subr.bf16.mxu0 0
  %830 = vmatpush1.bf16.msra.mxu0 0
  %831 = vmatprep.subr.bf16.mxu0 0
  %832 = vmatpush1.bf16.msra.mxu0 0
  %833 = vmatprep.subr.bf16.mxu0 0
  %834 = vmatpush1.bf16.msra.mxu0 0
  %835 = vmatprep.subr.bf16.mxu0 0
  %836 = vmatpush1.bf16.msra.mxu0 0
  %837 = vmatprep.subr.bf16.mxu0 0
  %838 = vmatpush1.bf16.msra.mxu0 0
  %839 = vmatprep.mubr.bf16.mxu0 0
  %840 = vmatmul.mubr.bf16.gmra.mrb[0].mxu0 %v805
  %v841 = vpop.f32.mrb[0].mxu0
  %v842 = vadd.f32 %v791, %v841
  %v843 = vpop.f32.mrb[0].mxu0
  %v844 = vpop.f32.mrb[0].mxu0
  %v845 = vpop.f32.mrb[0].mxu0
  %846 = vdwg.mxu0
  %847 = vst [vmem:[%s5] sm:$0xff] %v842
  // Predicated region
  $region22: #{qnetwork_forward.1} parent=0 // pred_check
    _
  $region23: #{qnetwork_forward.1} parent=0 // pred_check_branch
    %849 = sbr.rel (0) target = $region25
  $region24: #{qnetwork_forward.1} parent=0 // pred_region
    _
  $region25: #{qnetwork_forward.1} parent=0 // pred_fallthru
    _
  // Predicated region
  $region26: #{qnetwork_forward.1} parent=0 // pred_check
    _
  $region27: #{qnetwork_forward.1} parent=0 // pred_check_branch
    %851 = sbr.rel (0) target = $region29
  $region28: #{qnetwork_forward.1} parent=0 // pred_region
    _
  $region29: #{qnetwork_forward.1} parent=0 // pred_fallthru
    _

</llo_original>
